<compile_context>
chip_gen: v6e
topology: v6e:2x2x1
jax: 0.10.0
libtpu: 0.0.40
codegen_flags: <defaults>
</compile_context>

<pallas_src>
import jax
import jax.numpy as jnp
from jax.experimental import pallas as pl
from jax.experimental.pallas import tpu as pltpu


def _round_up(n, m):
    return ((n + m - 1) // m) * m


def _pad2(a, rows, cols):
    pr, pc = rows - a.shape[0], cols - a.shape[1]
    if pr or pc:
        a = jnp.pad(a, ((0, pr), (0, pc)))
    return a


# ---------------------------------------------------------------------------
# rank > 0 :  y = x @ origin + mask_scale * ((x @ down^T) @ up^T)
# ---------------------------------------------------------------------------
def _lowrank_kernel(x_ref, origin_ref, down_ref, up_ref, mask_ref, out_ref,
                    acc_ref, h_ref):
    k = pl.program_id(2)

    @pl.when(k == 0)
    def _init():
        acc_ref[...] = jnp.zeros_like(acc_ref)
        h_ref[...] = jnp.zeros_like(h_ref)

    x = x_ref[...]                       # (TM, TK): loaded once, MXU-fed twice
    acc_ref[...] += jnp.dot(x, origin_ref[...],
                            preferred_element_type=jnp.float32)
    h_ref[...] += jnp.dot(x, down_ref[...],
                          preferred_element_type=jnp.float32)

    @pl.when(k == pl.num_programs(2) - 1)
    def _finalize():
        lora = jnp.dot(h_ref[...].astype(up_ref.dtype), up_ref[...],
                       preferred_element_type=jnp.float32)
        out_ref[...] = (acc_ref[...] + mask_ref[...] * lora).astype(out_ref.dtype)


def lowrank_linear(x, origin, down_t, up_t, key, *, scaling=1.0, p_drop=0.25,
                   training=True, tm=256, tn=512, tk=512):
    """rank > 0 forward.

    down_t: (input_dim, rank)  = down.weight.T  (pre-transposed once at setup)
    up_t:   (rank, output_dim) = up.weight.T
    """
    B, D_in = x.shape
    D_out = origin.shape[1]
    rank = down_t.shape[1]

    # Lane-dense tiles (lane axis multiple of 128, sublane axis multiple of 8),
    # clamped to the padded problem size.
    TM = min(tm, _round_up(B, 8))
    TN = min(tn, _round_up(D_out, 128))
    TK = min(tk, _round_up(D_in, 128))
    R = _round_up(rank, 128)             # lane-dense adapter slab

    Bp, Kp, Np = _round_up(B, TM), _round_up(D_in, TK), _round_up(D_out, TN)

    out_dtype = x.dtype
    xp = _pad2(x, Bp, Kp)
    originp = _pad2(origin.astype(x.dtype), Kp, Np)   # cast once in the wrapper
    downp = _pad2(down_t.astype(x.dtype), Kp, R)
    upp = _pad2(up_t.astype(x.dtype), R, Np)

    # Dropout folded into a single pre-scaled keep mask: keep * scaling/(1-p).
    # TODO(synk): uses jax.random, so it cannot bit-match torch.nn.Dropout's RNG
    # stream; distributionally identical (drop prob p, 1/(1-p) rescale of kept).
    if training and p_drop > 0.0:
        keep = jax.random.bernoulli(key, 1.0 - p_drop, (B, D_out))
        mask = keep.astype(jnp.float32) * (scaling / (1.0 - p_drop))
    else:
        mask = jnp.full((B, D_out), scaling, dtype=jnp.float32)
    maskp = _pad2(mask, Bp, Np)

    grid = (Bp // TM, Np // TN, Kp // TK)

    flops = 2 * Bp * Kp * (Np + R) + 2 * Bp * R * Np
    bytes_accessed = (xp.size * xp.dtype.itemsize
                      + originp.size * originp.dtype.itemsize
                      + downp.size * downp.dtype.itemsize
                      + upp.size * upp.dtype.itemsize
                      + maskp.size * maskp.dtype.itemsize
                      + Bp * Np * jnp.dtype(out_dtype).itemsize)

    out = pl.pallas_call(
        _lowrank_kernel,
        out_shape=jax.ShapeDtypeStruct((Bp, Np), out_dtype),
        grid=grid,
        in_specs=[
            pl.BlockSpec((TM, TK), lambda i, j, k: (i, k)),   # x
            pl.BlockSpec((TK, TN), lambda i, j, k: (k, j)),   # origin (streamed)
            pl.BlockSpec((TK, R), lambda i, j, k: (k, 0)),    # down^T (tiny)
            pl.BlockSpec((R, TN), lambda i, j, k: (0, j)),    # up^T (tiny)
            pl.BlockSpec((TM, TN), lambda i, j, k: (i, j)),   # pre-scaled mask
        ],
        out_specs=pl.BlockSpec((TM, TN), lambda i, j, k: (i, j)),
        scratch_shapes=[pltpu.VMEM((TM, TN), jnp.float32),    # acc: x @ origin
                        pltpu.VMEM((TM, R), jnp.float32)],    # acc: x @ down^T
        compiler_params=pltpu.CompilerParams(
            dimension_semantics=("parallel", "parallel", "arbitrary"),
            vmem_limit_bytes=32 * 1024 * 1024),
        cost_estimate=pl.CostEstimate(flops=flops, transcendentals=0,
                                      bytes_accessed=bytes_accessed),
    )(xp, originp, downp, upp, maskp)
    return out[:B, :D_out]


# ---------------------------------------------------------------------------
# rank == 0 :  y = x @ origin.type(x.dtype)
# ---------------------------------------------------------------------------
def _plain_kernel(x_ref, origin_ref, out_ref, acc_ref):
    k = pl.program_id(2)

    @pl.when(k == 0)
    def _init():
        acc_ref[...] = jnp.zeros_like(acc_ref)

    acc_ref[...] += jnp.dot(x_ref[...], origin_ref[...],
                            preferred_element_type=jnp.float32)

    @pl.when(k == pl.num_programs(2) - 1)
    def _finalize():
        out_ref[...] = acc_ref[...].astype(out_ref.dtype)


def plain_linear(x, origin, *, tm=256, tn=512, tk=512):
    """rank == 0 forward."""
    B, D_in = x.shape
    D_out = origin.shape[1]

    TM = min(tm, _round_up(B, 8))
    TN = min(tn, _round_up(D_out, 128))
    TK = min(tk, _round_up(D_in, 128))
    Bp, Kp, Np = _round_up(B, TM), _round_up(D_in, TK), _round_up(D_out, TN)

    xp = _pad2(x, Bp, Kp)
    originp = _pad2(origin.astype(x.dtype), Kp, Np)   # origin.type(x.dtype), once

    grid = (Bp // TM, Np // TN, Kp // TK)
    flops = 2 * Bp * Kp * Np
    bytes_accessed = (xp.size * xp.dtype.itemsize
                      + originp.size * originp.dtype.itemsize
                      + Bp * Np * jnp.dtype(x.dtype).itemsize)

    out = pl.pallas_call(
        _plain_kernel,
        out_shape=jax.ShapeDtypeStruct((Bp, Np), x.dtype),
        grid=grid,
        in_specs=[pl.BlockSpec((TM, TK), lambda i, j, k: (i, k)),
                  pl.BlockSpec((TK, TN), lambda i, j, k: (k, j))],
        out_specs=pl.BlockSpec((TM, TN), lambda i, j, k: (i, j)),
        scratch_shapes=[pltpu.VMEM((TM, TN), jnp.float32)],
        compiler_params=pltpu.CompilerParams(
            dimension_semantics=("parallel", "parallel", "arbitrary"),
            vmem_limit_bytes=32 * 1024 * 1024),
        cost_estimate=pl.CostEstimate(flops=flops, transcendentals=0,
                                      bytes_accessed=bytes_accessed),
    )(xp, originp)
    return out[:B, :D_out]


if __name__ == "__main__":
    # deterministic synthetic parameters (module __init__ shapes)
    rank, input_dim, output_dim, batch = 4, 32, 32, 8
    root = jax.random.PRNGKey(0)
    kx, ko, kd, ku, kdrop = jax.random.split(root, 5)

    x = jax.random.normal(kx, (batch, input_dim), dtype=jnp.float32)
    origin = jax.random.normal(ko, (input_dim, output_dim), dtype=jnp.float32)
    # PyTorch nn.Linear layouts: down.weight (rank, in), up.weight (out, rank)
    down_w = jax.random.normal(kd, (rank, input_dim), dtype=jnp.float32) * 0.1
    up_w = jax.random.normal(ku, (output_dim, rank), dtype=jnp.float32) * 0.1
    # Pre-transpose once at parameter setup (not per forward call).
    down_t, up_t = down_w.T, up_w.T

    scaling, p_drop = 1.0, 0.25

    # training-mode forward (dropout active, mask derived from kdrop)
    y_train = lowrank_linear(x, origin, down_t, up_t, kdrop,
                             scaling=scaling, p_drop=p_drop, training=True)
    jax.block_until_ready(y_train)
    keep = jax.random.bernoulli(kdrop, 1.0 - p_drop,
                                (batch, output_dim)).astype(jnp.float32)
    ref_train = x @ origin + (scaling / (1.0 - p_drop)) * keep * ((x @ down_t) @ up_t)
    assert jnp.allclose(y_train, ref_train, atol=1e-4, rtol=1e-4)

    # eval-mode forward (dropout = identity)
    y_eval = lowrank_linear(x, origin, down_t, up_t, kdrop,
                            scaling=scaling, p_drop=p_drop, training=False)
    ref_eval = x @ origin + scaling * ((x @ down_t) @ up_t)
    assert jnp.allclose(y_eval, ref_eval, atol=1e-4, rtol=1e-4)

    # rank == 0 path
    y0 = plain_linear(x, origin)
    assert jnp.allclose(y0, x @ origin, atol=1e-4, rtol=1e-4)

    jax.block_until_ready((y_train, y_eval, y0))
    print("KERNEL_OK")
</pallas_src>

<mosaic_0001>
module attributes {stable_mosaic.version = 11 : i64} {
  func.func @_lowrank_kernel(%arg0: i32, %arg1: i32, %arg2: i32, %arg3: memref<8x128xf32, #tpu.memory_space<vmem>>, %arg4: memref<128x128xf32, #tpu.memory_space<vmem>>, %arg5: memref<128x128xf32, #tpu.memory_space<vmem>>, %arg6: memref<128x128xf32, #tpu.memory_space<vmem>>, %arg7: memref<8x128xf32, #tpu.memory_space<vmem>>, %arg8: memref<8x128xf32, #tpu.memory_space<vmem>>, %arg9: memref<8x128xf32, #tpu.memory_space<vmem>>, %arg10: memref<8x128xf32, #tpu.memory_space<vmem>>) attributes {dimension_semantics = [#tpu.dimension_semantics<parallel>, #tpu.dimension_semantics<parallel>, #tpu.dimension_semantics<arbitrary>], iteration_bounds = array<i64: 1, 1, 1>, scalar_prefetch = 0 : i64, scratch_operands = 2 : i64, tpu.core_type = #tpu.core_type<tc>, window_params = [{transform_indices = @transform_0, window_bounds = array<i64: 8, 128>}, {transform_indices = @transform_1, window_bounds = array<i64: 128, 128>}, {transform_indices = @transform_2, window_bounds = array<i64: 128, 128>}, {transform_indices = @transform_3, window_bounds = array<i64: 128, 128>}, {transform_indices = @transform_4, window_bounds = array<i64: 8, 128>}, {transform_indices = @transform_5, window_bounds = array<i64: 8, 128>}]} {
    %c0_i32 = arith.constant 0 : i32
    %0 = arith.cmpi eq, %arg2, %c0_i32 : i32
    %1 = arith.extui %0 : i1 to i32
    %c0_i32_0 = arith.constant 0 : i32
    %2 = arith.cmpi ne, %1, %c0_i32_0 : i32
    scf.if %2 {
      %cst_17 = arith.constant 0.000000e+00 : f32
      %17 = vector.broadcast %cst_17 : f32 to vector<8x128xf32>
      %c0_18 = arith.constant 0 : index
      %c0_19 = arith.constant 0 : index
      %18 = vector.load %arg9[%c0_18, %c0_19] : memref<8x128xf32, #tpu.memory_space<vmem>>, vector<8x128xf32>
      tpu.vector_store %arg9[%c0_18, %c0_19], %17 {strides = array<i32>} : memref<8x128xf32, #tpu.memory_space<vmem>>, vector<8x128xf32>,
      %cst_20 = arith.constant 0.000000e+00 : f32
      %19 = vector.broadcast %cst_20 : f32 to vector<8x128xf32>
      %c0_21 = arith.constant 0 : index
      %c0_22 = arith.constant 0 : index
      %20 = vector.load %arg10[%c0_21, %c0_22] : memref<8x128xf32, #tpu.memory_space<vmem>>, vector<8x128xf32>
      tpu.vector_store %arg10[%c0_21, %c0_22], %19 {strides = array<i32>} : memref<8x128xf32, #tpu.memory_space<vmem>>, vector<8x128xf32>,
    } else {
    }
    %c0 = arith.constant 0 : index
    %c0_1 = arith.constant 0 : index
    %3 = vector.load %arg3[%c0, %c0_1] : memref<8x128xf32, #tpu.memory_space<vmem>>, vector<8x128xf32>
    %c0_2 = arith.constant 0 : index
    %c0_3 = arith.constant 0 : index
    %4 = vector.load %arg9[%c0_2, %c0_3] : memref<8x128xf32, #tpu.memory_space<vmem>>, vector<8x128xf32>
    %c0_4 = arith.constant 0 : index
    %c0_5 = arith.constant 0 : index
    %5 = vector.load %arg4[%c0_4, %c0_5] : memref<128x128xf32, #tpu.memory_space<vmem>>, vector<128x128xf32>
    %cst = arith.constant dense<0.000000e+00> : vector<8x128xf32>
    %6 = tpu.matmul %3, %5, %cst {dimension_numbers = #tpu.dot_dimension_numbers<[1], [0], [0], [1], [0, 0, 1, 1], [], []>} : vector<8x128xf32>, vector<128x128xf32>, vector<8x128xf32> -> vector<8x128xf32>
    %7 = arith.addf %4, %6 : vector<8x128xf32>
    %c0_6 = arith.constant 0 : index
    %c0_7 = arith.constant 0 : index
    %8 = vector.load %arg9[%c0_6, %c0_7] : memref<8x128xf32, #tpu.memory_space<vmem>>, vector<8x128xf32>
    tpu.vector_store %arg9[%c0_6, %c0_7], %7 {strides = array<i32>} : memref<8x128xf32, #tpu.memory_space<vmem>>, vector<8x128xf32>,
    %c0_8 = arith.constant 0 : index
    %c0_9 = arith.constant 0 : index
    %9 = vector.load %arg10[%c0_8, %c0_9] : memref<8x128xf32, #tpu.memory_space<vmem>>, vector<8x128xf32>
    %c0_10 = arith.constant 0 : index
    %c0_11 = arith.constant 0 : index
    %10 = vector.load %arg5[%c0_10, %c0_11] : memref<128x128xf32, #tpu.memory_space<vmem>>, vector<128x128xf32>
    %cst_12 = arith.constant dense<0.000000e+00> : vector<8x128xf32>
    %11 = tpu.matmul %3, %10, %cst_12 {dimension_numbers = #tpu.dot_dimension_numbers<[1], [0], [0], [1], [0, 0, 1, 1], [], []>} : vector<8x128xf32>, vector<128x128xf32>, vector<8x128xf32> -> vector<8x128xf32>
    %12 = arith.addf %9, %11 : vector<8x128xf32>
    %c0_13 = arith.constant 0 : index
    %c0_14 = arith.constant 0 : index
    %13 = vector.load %arg10[%c0_13, %c0_14] : memref<8x128xf32, #tpu.memory_space<vmem>>, vector<8x128xf32>
    tpu.vector_store %arg10[%c0_13, %c0_14], %12 {strides = array<i32>} : memref<8x128xf32, #tpu.memory_space<vmem>>, vector<8x128xf32>,
    %c0_i32_15 = arith.constant 0 : i32
    %14 = arith.cmpi eq, %arg2, %c0_i32_15 : i32
    %15 = arith.extui %14 : i1 to i32
    %c0_i32_16 = arith.constant 0 : i32
    %16 = arith.cmpi ne, %15, %c0_i32_16 : i32
    scf.if %16 {
      %c0_17 = arith.constant 0 : index
      %c0_18 = arith.constant 0 : index
      %17 = vector.load %arg10[%c0_17, %c0_18] : memref<8x128xf32, #tpu.memory_space<vmem>>, vector<8x128xf32>
      %c0_19 = arith.constant 0 : index
      %c0_20 = arith.constant 0 : index
      %18 = vector.load %arg6[%c0_19, %c0_20] : memref<128x128xf32, #tpu.memory_space<vmem>>, vector<128x128xf32>
      %cst_21 = arith.constant dense<0.000000e+00> : vector<8x128xf32>
      %19 = tpu.matmul %17, %18, %cst_21 {dimension_numbers = #tpu.dot_dimension_numbers<[1], [0], [0], [1], [0, 0, 1, 1], [], []>} : vector<8x128xf32>, vector<128x128xf32>, vector<8x128xf32> -> vector<8x128xf32>
      %c0_22 = arith.constant 0 : index
      %c0_23 = arith.constant 0 : index
      %20 = vector.load %arg9[%c0_22, %c0_23] : memref<8x128xf32, #tpu.memory_space<vmem>>, vector<8x128xf32>
      %c0_24 = arith.constant 0 : index
      %c0_25 = arith.constant 0 : index
      %21 = vector.load %arg7[%c0_24, %c0_25] : memref<8x128xf32, #tpu.memory_space<vmem>>, vector<8x128xf32>
      %22 = arith.mulf %21, %19 : vector<8x128xf32>
      %23 = arith.addf %20, %22 : vector<8x128xf32>
      %c0_26 = arith.constant 0 : index
      %c0_27 = arith.constant 0 : index
      %24 = vector.load %arg8[%c0_26, %c0_27] : memref<8x128xf32, #tpu.memory_space<vmem>>, vector<8x128xf32>
      tpu.vector_store %arg8[%c0_26, %c0_27], %23 {strides = array<i32>} : memref<8x128xf32, #tpu.memory_space<vmem>>, vector<8x128xf32>,
    } else {
    }
    return
  }
  func.func @transform_0(%arg0: i32, %arg1: i32, %arg2: i32) -> (i32, i32) {
    %c0_i32 = arith.constant 0 : i32
    return %arg0, %arg2 : i32, i32
  }
  func.func @transform_1(%arg0: i32, %arg1: i32, %arg2: i32) -> (i32, i32) {
    %c0_i32 = arith.constant 0 : i32
    return %arg2, %arg1 : i32, i32
  }
  func.func @transform_2(%arg0: i32, %arg1: i32, %arg2: i32) -> (i32, i32) {
    %c0_i32 = arith.constant 0 : i32
    %c0_i32_0 = arith.constant 0 : i32
    return %arg2, %c0_i32 : i32, i32
  }
  func.func @transform_3(%arg0: i32, %arg1: i32, %arg2: i32) -> (i32, i32) {
    %c0_i32 = arith.constant 0 : i32
    %c0_i32_0 = arith.constant 0 : i32
    return %c0_i32, %arg1 : i32, i32
  }
  func.func @transform_4(%arg0: i32, %arg1: i32, %arg2: i32) -> (i32, i32) {
    %c0_i32 = arith.constant 0 : i32
    return %arg0, %arg1 : i32, i32
  }
  func.func @transform_5(%arg0: i32, %arg1: i32, %arg2: i32) -> (i32, i32) {
    %c0_i32 = arith.constant 0 : i32
    return %arg0, %arg1 : i32, i32
  }
}

</mosaic_0001>

<llo_original>
// kernel: tpu_custom_call.1
$region0: #{tpu_custom_call.1}
  #allocation0 [shape = 'u32[]', space=smem, size = 0x4, offset = 0x4, fixed_abs, tag = 'smem constant byte address 0x4 - core index']
  #allocation1 [shape = 'u32[144,128]{1,0:T(1,128)}', space=vmem, size = 0x12000, scoped, tag = 'internal scratch']
  #allocation2 [shape = 'f32[8,128]{1,0:T(8,128)}', space=vmem, size = 0x1000, scoped, tag = 'scratch operand']
  #allocation3 [shape = 'f32[8,128]{1,0:T(8,128)}', space=vmem, size = 0x1000, scoped, tag = 'scratch operand']
  %s0 = inlined_call_operand.hbm [shape: f32[8,128], index: 0, kind: input, shape index: {}]
  %s1 = inlined_call_operand.hbm [shape: f32[128,128], index: 1, kind: input, shape index: {}]
  %s2 = inlined_call_operand.hbm [shape: f32[128,128], index: 2, kind: input, shape index: {}]
  %s3 = inlined_call_operand.hbm [shape: f32[128,128], index: 3, kind: input, shape index: {}]
  %s4 = inlined_call_operand.hbm [shape: f32[8,128], index: 4, kind: input, shape index: {}]
  %s5 = inlined_call_operand.hbm [shape: f32[8,128], index: 5, kind: output, shape index: {}]
  %s6 = sld [smem:[#allocation0]]
  $region58: #{tpu_custom_call.1} parent=0
    _
  %s8 = ssub.s32 1, %s6
  %s9 = scalar_select 0, %s8, %s6
  $region1: #{tpu_custom_call.1} parent=0
    #allocation4 [shape = 'u8[4096]{0}', space=vmem, size = 0x1000, scoped, tag = 'input window, operand 0, single buffered']
    #allocation5 [shape = 's32[1]{0}', space=sflag, size = 0x4, scoped, tag = 'scoped memory for tpu_custom_call.1']
    #allocation6 [shape = 's32[1]{0}', space=sflag, size = 0x4, scoped, tag = 'scoped memory for tpu_custom_call.1']
    #allocation7 [shape = 'u8[65536]{0}', space=vmem, size = 0x10000, scoped, tag = 'input window, operand 1, single buffered']
    #allocation8 [shape = 's32[1]{0}', space=sflag, size = 0x4, scoped, tag = 'scoped memory for tpu_custom_call.1']
    #allocation9 [shape = 'u8[65536]{0}', space=vmem, size = 0x10000, scoped, tag = 'input window, operand 2, single buffered']
    #allocation10 [shape = 'u8[65536]{0}', space=vmem, size = 0x10000, scoped, tag = 'input window, operand 3, single buffered']
    #allocation11 [shape = 's32[1]{0}', space=sflag, size = 0x4, scoped, tag = 'scoped memory for tpu_custom_call.1']
    #allocation12 [shape = 'u8[4096]{0}', space=vmem, size = 0x1000, scoped, tag = 'input window, operand 4, single buffered']
    #allocation13 [shape = 'u8[4096]{0}', space=vmem, size = 0x1000, scoped, tag = 'output window, operand 0, single buffered']
    %10 = vsyncpa [#allocation5], 0
    %11 = vsyncpa [#allocation8], 0
    %12 = vsyncpa [#allocation11], 0
    %13 = vsyncpa [#allocation6], 0
    // Predicated region
    $region2: #{tpu_custom_call.1} parent=1 // pred_check
      _
    $region3: #{tpu_custom_call.1} parent=1 // pred_check_branch
      %15 = sbr.rel (0) target = $region5
    $region4: #{tpu_custom_call.1} parent=1 // pred_region
      %s17 = ssub.s32 128, 128
      %18 = vsyncadd [#allocation5], %s17
      %s20 = sshll.u32 [#allocation4], 4
      %s21 = int_to_ptr.vmem [resolvable:$true] %s20
      %23 = dma.hbm_to_vmem [thread:$0]  %s0, 128, %s21, [#allocation5]
    $region5: #{tpu_custom_call.1} parent=1 // pred_fallthru
      _
    // Predicated region
    $region6: #{tpu_custom_call.1} parent=1 // pred_check
      _
    $region7: #{tpu_custom_call.1} parent=1 // pred_check_branch
      %25 = sbr.rel (0) target = $region9
    $region8: #{tpu_custom_call.1} parent=1 // pred_region
      %s27 = ssub.s32 2048, 2048
      %28 = vsyncadd [#allocation8], %s27
      %s29 = sshll.u32 [#allocation7], 4
      %s30 = int_to_ptr.vmem [resolvable:$true] %s29
      %35 = dma.hbm_to_vmem [thread:$0]  %s1, 2048, %s30, [#allocation8], 128, 128, 8
    $region9: #{tpu_custom_call.1} parent=1 // pred_fallthru
      _
    // Predicated region
    $region10: #{tpu_custom_call.1} parent=1 // pred_check
      _
    $region11: #{tpu_custom_call.1} parent=1 // pred_check_branch
      %37 = sbr.rel (0) target = $region13
    $region12: #{tpu_custom_call.1} parent=1 // pred_region
      %s39 = ssub.s32 2048, 2048
      %40 = vsyncadd [#allocation8], %s39
      %s41 = sshll.u32 [#allocation9], 4
      %s42 = int_to_ptr.vmem [resolvable:$true] %s41
      %47 = dma.hbm_to_vmem [thread:$0]  %s2, 2048, %s42, [#allocation8], 128, 128, 8
    $region13: #{tpu_custom_call.1} parent=1 // pred_fallthru
      _
    // Predicated region
    $region14: #{tpu_custom_call.1} parent=1 // pred_check
      _
    $region15: #{tpu_custom_call.1} parent=1 // pred_check_branch
      %49 = sbr.rel (0) target = $region17
    $region16: #{tpu_custom_call.1} parent=1 // pred_region
      %s51 = ssub.s32 2048, 2048
      %52 = vsyncadd [#allocation11], %s51
      %s53 = sshll.u32 [#allocation10], 4
      %s54 = int_to_ptr.vmem [resolvable:$true] %s53
      %59 = dma.hbm_to_vmem [thread:$0]  %s3, 2048, %s54, [#allocation11], 128, 128, 8
    $region17: #{tpu_custom_call.1} parent=1 // pred_fallthru
      _
    // Predicated region
    $region18: #{tpu_custom_call.1} parent=1 // pred_check
      _
    $region19: #{tpu_custom_call.1} parent=1 // pred_check_branch
      %61 = sbr.rel (0) target = $region21
    $region20: #{tpu_custom_call.1} parent=1 // pred_region
      %s63 = ssub.s32 128, 128
      %64 = vsyncadd [#allocation11], %s63
      %s66 = sshll.u32 [#allocation12], 4
      %s67 = int_to_ptr.vmem [resolvable:$true] %s66
      %69 = dma.hbm_to_vmem [thread:$0]  %s4, 128, %s67, [#allocation11]
    $region21: #{tpu_custom_call.1} parent=1 // pred_fallthru
      _
    // Predicated region
    $region22: #{tpu_custom_call.1} parent=1 // pred_check
      _
    $region23: #{tpu_custom_call.1} parent=1 // pred_check_branch
      %71 = sbr.rel (0) target = $region25
    $region24: #{tpu_custom_call.1} parent=1 // pred_region
      %72 = dma.done [#allocation5], 128
    $region25: #{tpu_custom_call.1} parent=1 // pred_fallthru
      _
    // Predicated region
    $region26: #{tpu_custom_call.1} parent=1 // pred_check
      _
    $region27: #{tpu_custom_call.1} parent=1 // pred_check_branch
      %74 = sbr.rel (0) target = $region29
    $region28: #{tpu_custom_call.1} parent=1 // pred_region
      %75 = dma.done [#allocation8], 2048
    $region29: #{tpu_custom_call.1} parent=1 // pred_fallthru
      _
    // Predicated region
    $region30: #{tpu_custom_call.1} parent=1 // pred_check
      _
    $region31: #{tpu_custom_call.1} parent=1 // pred_check_branch
      %77 = sbr.rel (0) target = $region33
    $region32: #{tpu_custom_call.1} parent=1 // pred_region
      %78 = dma.done [#allocation8], 2048
    $region33: #{tpu_custom_call.1} parent=1 // pred_fallthru
      _
    // Predicated region
    $region34: #{tpu_custom_call.1} parent=1 // pred_check
      _
    $region35: #{tpu_custom_call.1} parent=1 // pred_check_branch
      %80 = sbr.rel (0) target = $region37
    $region36: #{tpu_custom_call.1} parent=1 // pred_region
      %81 = dma.done [#allocation11], 2048
    $region37: #{tpu_custom_call.1} parent=1 // pred_fallthru
      _
    // Predicated region
    $region38: #{tpu_custom_call.1} parent=1 // pred_check
      _
    $region39: #{tpu_custom_call.1} parent=1 // pred_check_branch
      %83 = sbr.rel (0) target = $region41
    $region40: #{tpu_custom_call.1} parent=1 // pred_region
      %84 = dma.done [#allocation11], 128
    $region41: #{tpu_custom_call.1} parent=1 // pred_fallthru
      _
    %p85 = scmp.eq.s32.totalorder 0, 0
    // Predicated region
    $region42: #{tpu_custom_call.1} parent=1 // pred_check
      %p86 = pneg %p85
    $region43: #{tpu_custom_call.1} parent=1 // pred_check_branch
      %88 = sbr.rel (%p86) target = $region45
    $region44: #{tpu_custom_call.1} parent=1 // pred_region
      %89 = vst [vmem:[#allocation2] sm:$0xff] 0.0
      %90 = vst [vmem:[#allocation3] sm:$0xff] 0.0
    $region45: #{tpu_custom_call.1} parent=1 // pred_fallthru
      _
    %v91 = vld [vmem:[#allocation4] sm:$0xff]
    %v92 = vld [vmem:[#allocation2] sm:$0xff]
    %v93 = vld [vmem:[#allocation7] sm:$0xff]
    %v94 = vld [vmem:[#allocation7 + $0x8] sm:$0xff]
    %v95 = vld [vmem:[#allocation7 + $0x10] sm:$0xff]
    %v96 = vld [vmem:[#allocation7 + $0x18] sm:$0xff]
    %v97 = vld [vmem:[#allocation7 + $0x20] sm:$0xff]
    %v98 = vld [vmem:[#allocation7 + $0x28] sm:$0xff]
    %v99 = vld [vmem:[#allocation7 + $0x30] sm:$0xff]
    %v100 = vld [vmem:[#allocation7 + $0x38] sm:$0xff]
    %v101 = vld [vmem:[#allocation7 + $0x40] sm:$0xff]
    %v102 = vld [vmem:[#allocation7 + $0x48] sm:$0xff]
    %v103 = vld [vmem:[#allocation7 + $0x50] sm:$0xff]
    %v104 = vld [vmem:[#allocation7 + $0x58] sm:$0xff]
    %v105 = vld [vmem:[#allocation7 + $0x60] sm:$0xff]
    %v106 = vld [vmem:[#allocation7 + $0x68] sm:$0xff]
    %v107 = vld [vmem:[#allocation7 + $0x70] sm:$0xff]
    %v108 = vld [vmem:[#allocation7 + $0x78] sm:$0xff]
    %109 = vmatprep.subr.mxu0 0.0
    %110 = vmatpush1.msra.mxu0 %v108
    %111 = vmatprep.subr.mxu0 0.0
    %112 = vmatpush1.msra.mxu0 %v107
    %113 = vmatprep.subr.mxu0 0.0
    %114 = vmatpush1.msra.mxu0 %v106
    %115 = vmatprep.subr.mxu0 0.0
    %116 = vmatpush1.msra.mxu0 %v105
    %117 = vmatprep.subr.mxu0 0.0
    %118 = vmatpush1.msra.mxu0 %v104
    %119 = vmatprep.subr.mxu0 0.0
    %120 = vmatpush1.msra.mxu0 %v103
    %121 = vmatprep.subr.mxu0 0.0
    %122 = vmatpush1.msra.mxu0 %v102
    %123 = vmatprep.subr.mxu0 0.0
    %124 = vmatpush1.msra.mxu0 %v101
    %125 = vmatprep.subr.mxu0 0.0
    %126 = vmatpush1.msra.mxu0 %v100
    %127 = vmatprep.subr.mxu0 0.0
    %128 = vmatpush1.msra.mxu0 %v99
    %129 = vmatprep.subr.mxu0 0.0
    %130 = vmatpush1.msra.mxu0 %v98
    %131 = vmatprep.subr.mxu0 0.0
    %132 = vmatpush1.msra.mxu0 %v97
    %133 = vmatprep.subr.mxu0 0.0
    %134 = vmatpush1.msra.mxu0 %v96
    %135 = vmatprep.subr.mxu0 0.0
    %136 = vmatpush1.msra.mxu0 %v95
    %137 = vmatprep.subr.mxu0 0.0
    %138 = vmatpush1.msra.mxu0 %v94
    %139 = vmatprep.subr.mxu0 0.0
    %140 = vmatpush1.msra.mxu0 %v93
    %141 = vmatprep.subr.mxu0 0.0
    %142 = vmatpush2.msra.mxu0 0.0
    %143 = vmatprep.subr.mxu0 0.0
    %144 = vmatpush2.msra.mxu0 0.0
    %145 = vmatprep.subr.mxu0 0.0
    %146 = vmatpush2.msra.mxu0 0.0
    %147 = vmatprep.subr.mxu0 0.0
    %148 = vmatpush2.msra.mxu0 0.0
    %149 = vmatprep.subr.mxu0 0.0
    %150 = vmatpush2.msra.mxu0 0.0
    %151 = vmatprep.subr.mxu0 0.0
    %152 = vmatpush2.msra.mxu0 0.0
    %153 = vmatprep.subr.mxu0 0.0
    %154 = vmatpush2.msra.mxu0 0.0
    %155 = vmatprep.subr.mxu0 0.0
    %156 = vmatpush2.msra.mxu0 0.0
    %157 = vmatprep.subr.mxu0 0.0
    %158 = vmatpush2.msra.mxu0 0.0
    %159 = vmatprep.subr.mxu0 0.0
    %160 = vmatpush2.msra.mxu0 0.0
    %161 = vmatprep.subr.mxu0 0.0
    %162 = vmatpush2.msra.mxu0 0.0
    %163 = vmatprep.subr.mxu0 0.0
    %164 = vmatpush2.msra.mxu0 0.0
    %165 = vmatprep.subr.mxu0 0.0
    %166 = vmatpush2.msra.mxu0 0.0
    %167 = vmatprep.subr.mxu0 0.0
    %168 = vmatpush2.msra.mxu0 0.0
    %169 = vmatprep.subr.mxu0 0.0
    %170 = vmatpush2.msra.mxu0 0.0
    %171 = vmatprep.subr.mxu0 0.0
    %172 = vmatpush2.msra.mxu0 0.0
    %173 = vmatprep.mubr.f32.mxu0 0.0
    %174 = vmatmul.mubr.f32.gmra.mxu0 %v91
    %v175 = vpop.f32.mrf.mxu0
    %v176 = vadd.f32 0.0, %v175
    %v177 = vpop.f32.mrf.mxu0
    %178 = vdwg.mxu0
    %v179 = vadd.f32 %v92, %v176
    %180 = vst [vmem:[#allocation2] sm:$0xff] %v179
    %v181 = vld [vmem:[#allocation3] sm:$0xff]
    %v182 = vld [vmem:[#allocation9] sm:$0xff]
    %v183 = vld [vmem:[#allocation9 + $0x8] sm:$0xff]
    %v184 = vld [vmem:[#allocation9 + $0x10] sm:$0xff]
    %v185 = vld [vmem:[#allocation9 + $0x18] sm:$0xff]
    %v186 = vld [vmem:[#allocation9 + $0x20] sm:$0xff]
    %v187 = vld [vmem:[#allocation9 + $0x28] sm:$0xff]
    %v188 = vld [vmem:[#allocation9 + $0x30] sm:$0xff]
    %v189 = vld [vmem:[#allocation9 + $0x38] sm:$0xff]
    %v190 = vld [vmem:[#allocation9 + $0x40] sm:$0xff]
    %v191 = vld [vmem:[#allocation9 + $0x48] sm:$0xff]
    %v192 = vld [vmem:[#allocation9 + $0x50] sm:$0xff]
    %v193 = vld [vmem:[#allocation9 + $0x58] sm:$0xff]
    %v194 = vld [vmem:[#allocation9 + $0x60] sm:$0xff]
    %v195 = vld [vmem:[#allocation9 + $0x68] sm:$0xff]
    %v196 = vld [vmem:[#allocation9 + $0x70] sm:$0xff]
    %v197 = vld [vmem:[#allocation9 + $0x78] sm:$0xff]
    %198 = vmatprep.subr.mxu0 0.0
    %199 = vmatpush1.msra.mxu0 %v197
    %200 = vmatprep.subr.mxu0 0.0
    %201 = vmatpush1.msra.mxu0 %v196
    %202 = vmatprep.subr.mxu0 0.0
    %203 = vmatpush1.msra.mxu0 %v195
    %204 = vmatprep.subr.mxu0 0.0
    %205 = vmatpush1.msra.mxu0 %v194
    %206 = vmatprep.subr.mxu0 0.0
    %207 = vmatpush1.msra.mxu0 %v193
    %208 = vmatprep.subr.mxu0 0.0
    %209 = vmatpush1.msra.mxu0 %v192
    %210 = vmatprep.subr.mxu0 0.0
    %211 = vmatpush1.msra.mxu0 %v191
    %212 = vmatprep.subr.mxu0 0.0
    %213 = vmatpush1.msra.mxu0 %v190
    %214 = vmatprep.subr.mxu0 0.0
    %215 = vmatpush1.msra.mxu0 %v189
    %216 = vmatprep.subr.mxu0 0.0
    %217 = vmatpush1.msra.mxu0 %v188
    %218 = vmatprep.subr.mxu0 0.0
    %219 = vmatpush1.msra.mxu0 %v187
    %220 = vmatprep.subr.mxu0 0.0
    %221 = vmatpush1.msra.mxu0 %v186
    %222 = vmatprep.subr.mxu0 0.0
    %223 = vmatpush1.msra.mxu0 %v185
    %224 = vmatprep.subr.mxu0 0.0
    %225 = vmatpush1.msra.mxu0 %v184
    %226 = vmatprep.subr.mxu0 0.0
    %227 = vmatpush1.msra.mxu0 %v183
    %228 = vmatprep.subr.mxu0 0.0
    %229 = vmatpush1.msra.mxu0 %v182
    %230 = vmatprep.subr.mxu0 0.0
    %231 = vmatpush2.msra.mxu0 0.0
    %232 = vmatprep.subr.mxu0 0.0
    %233 = vmatpush2.msra.mxu0 0.0
    %234 = vmatprep.subr.mxu0 0.0
    %235 = vmatpush2.msra.mxu0 0.0
    %236 = vmatprep.subr.mxu0 0.0
    %237 = vmatpush2.msra.mxu0 0.0
    %238 = vmatprep.subr.mxu0 0.0
    %239 = vmatpush2.msra.mxu0 0.0
    %240 = vmatprep.subr.mxu0 0.0
    %241 = vmatpush2.msra.mxu0 0.0
    %242 = vmatprep.subr.mxu0 0.0
    %243 = vmatpush2.msra.mxu0 0.0
    %244 = vmatprep.subr.mxu0 0.0
    %245 = vmatpush2.msra.mxu0 0.0
    %246 = vmatprep.subr.mxu0 0.0
    %247 = vmatpush2.msra.mxu0 0.0
    %248 = vmatprep.subr.mxu0 0.0
    %249 = vmatpush2.msra.mxu0 0.0
    %250 = vmatprep.subr.mxu0 0.0
    %251 = vmatpush2.msra.mxu0 0.0
    %252 = vmatprep.subr.mxu0 0.0
    %253 = vmatpush2.msra.mxu0 0.0
    %254 = vmatprep.subr.mxu0 0.0
    %255 = vmatpush2.msra.mxu0 0.0
    %256 = vmatprep.subr.mxu0 0.0
    %257 = vmatpush2.msra.mxu0 0.0
    %258 = vmatprep.subr.mxu0 0.0
    %259 = vmatpush2.msra.mxu0 0.0
    %260 = vmatprep.subr.mxu0 0.0
    %261 = vmatpush2.msra.mxu0 0.0
    %262 = vmatprep.mubr.f32.mxu0 0.0
    %263 = vmatmul.mubr.f32.gmra.mxu0 %v91
    %v264 = vpop.f32.mrf.mxu0
    %v265 = vadd.f32 0.0, %v264
    %v266 = vpop.f32.mrf.mxu0
    %267 = vdwg.mxu0
    %v268 = vadd.f32 %v181, %v265
    %269 = vst [vmem:[#allocation3] sm:$0xff] %v268
    // Predicated region
    $region46: #{tpu_custom_call.1} parent=1 // pred_check
      %p270 = pneg %p85
    $region47: #{tpu_custom_call.1} parent=1 // pred_check_branch
      %272 = sbr.rel (%p270) target = $region49
    $region48: #{tpu_custom_call.1} parent=1 // pred_region
      %v273 = vld [vmem:[#allocation3] sm:$0xff]
      %v274 = vld [vmem:[#allocation10] sm:$0xff]
      %v275 = vld [vmem:[#allocation10 + $0x8] sm:$0xff]
      %v276 = vld [vmem:[#allocation10 + $0x10] sm:$0xff]
      %v277 = vld [vmem:[#allocation10 + $0x18] sm:$0xff]
      %v278 = vld [vmem:[#allocation10 + $0x20] sm:$0xff]
      %v279 = vld [vmem:[#allocation10 + $0x28] sm:$0xff]
      %v280 = vld [vmem:[#allocation10 + $0x30] sm:$0xff]
      %v281 = vld [vmem:[#allocation10 + $0x38] sm:$0xff]
      %v282 = vld [vmem:[#allocation10 + $0x40] sm:$0xff]
      %v283 = vld [vmem:[#allocation10 + $0x48] sm:$0xff]
      %v284 = vld [vmem:[#allocation10 + $0x50] sm:$0xff]
      %v285 = vld [vmem:[#allocation10 + $0x58] sm:$0xff]
      %v286 = vld [vmem:[#allocation10 + $0x60] sm:$0xff]
      %v287 = vld [vmem:[#allocation10 + $0x68] sm:$0xff]
      %v288 = vld [vmem:[#allocation10 + $0x70] sm:$0xff]
      %v289 = vld [vmem:[#allocation10 + $0x78] sm:$0xff]
      %290 = vmatprep.subr.mxu0 0.0
      %291 = vmatpush1.msra.mxu0 %v289
      %292 = vmatprep.subr.mxu0 0.0
      %293 = vmatpush1.msra.mxu0 %v288
      %294 = vmatprep.subr.mxu0 0.0
      %295 = vmatpush1.msra.mxu0 %v287
      %296 = vmatprep.subr.mxu0 0.0
      %297 = vmatpush1.msra.mxu0 %v286
      %298 = vmatprep.subr.mxu0 0.0
      %299 = vmatpush1.msra.mxu0 %v285
      %300 = vmatprep.subr.mxu0 0.0
      %301 = vmatpush1.msra.mxu0 %v284
      %302 = vmatprep.subr.mxu0 0.0
      %303 = vmatpush1.msra.mxu0 %v283
      %304 = vmatprep.subr.mxu0 0.0
      %305 = vmatpush1.msra.mxu0 %v282
      %306 = vmatprep.subr.mxu0 0.0
      %307 = vmatpush1.msra.mxu0 %v281
      %308 = vmatprep.subr.mxu0 0.0
      %309 = vmatpush1.msra.mxu0 %v280
      %310 = vmatprep.subr.mxu0 0.0
      %311 = vmatpush1.msra.mxu0 %v279
      %312 = vmatprep.subr.mxu0 0.0
      %313 = vmatpush1.msra.mxu0 %v278
      %314 = vmatprep.subr.mxu0 0.0
      %315 = vmatpush1.msra.mxu0 %v277
      %316 = vmatprep.subr.mxu0 0.0
      %317 = vmatpush1.msra.mxu0 %v276
      %318 = vmatprep.subr.mxu0 0.0
      %319 = vmatpush1.msra.mxu0 %v275
      %320 = vmatprep.subr.mxu0 0.0
      %321 = vmatpush1.msra.mxu0 %v274
      %322 = vmatprep.subr.mxu0 0.0
      %323 = vmatpush2.msra.mxu0 0.0
      %324 = vmatprep.subr.mxu0 0.0
      %325 = vmatpush2.msra.mxu0 0.0
      %326 = vmatprep.subr.mxu0 0.0
      %327 = vmatpush2.msra.mxu0 0.0
      %328 = vmatprep.subr.mxu0 0.0
      %329 = vmatpush2.msra.mxu0 0.0
      %330 = vmatprep.subr.mxu0 0.0
      %331 = vmatpush2.msra.mxu0 0.0
      %332 = vmatprep.subr.mxu0 0.0
      %333 = vmatpush2.msra.mxu0 0.0
      %334 = vmatprep.subr.mxu0 0.0
      %335 = vmatpush2.msra.mxu0 0.0
      %336 = vmatprep.subr.mxu0 0.0
      %337 = vmatpush2.msra.mxu0 0.0
      %338 = vmatprep.subr.mxu0 0.0
      %339 = vmatpush2.msra.mxu0 0.0
      %340 = vmatprep.subr.mxu0 0.0
      %341 = vmatpush2.msra.mxu0 0.0
      %342 = vmatprep.subr.mxu0 0.0
      %343 = vmatpush2.msra.mxu0 0.0
      %344 = vmatprep.subr.mxu0 0.0
      %345 = vmatpush2.msra.mxu0 0.0
      %346 = vmatprep.subr.mxu0 0.0
      %347 = vmatpush2.msra.mxu0 0.0
      %348 = vmatprep.subr.mxu0 0.0
      %349 = vmatpush2.msra.mxu0 0.0
      %350 = vmatprep.subr.mxu0 0.0
      %351 = vmatpush2.msra.mxu0 0.0
      %352 = vmatprep.subr.mxu0 0.0
      %353 = vmatpush2.msra.mxu0 0.0
      %354 = vmatprep.mubr.f32.mxu0 0.0
      %355 = vmatmul.mubr.f32.gmra.mxu0 %v273
      %v356 = vpop.f32.mrf.mxu0
      %v357 = vadd.f32 0.0, %v356
      %v358 = vpop.f32.mrf.mxu0
      %359 = vdwg.mxu0
      %v360 = vld [vmem:[#allocation2] sm:$0xff]
      %v361 = vld [vmem:[#allocation12] sm:$0xff]
      %v362 = vmul.f32 %v361, %v357
      %v363 = vadd.f32 %v360, %v362
      %364 = vst [vmem:[#allocation13] sm:$0xff] %v363
    $region49: #{tpu_custom_call.1} parent=1 // pred_fallthru
      _
    // Predicated region
    $region50: #{tpu_custom_call.1} parent=1 // pred_check
      _
    $region51: #{tpu_custom_call.1} parent=1 // pred_check_branch
      %366 = sbr.rel (0) target = $region53
    $region52: #{tpu_custom_call.1} parent=1 // pred_region
      %s368 = ssub.s32 128, 128
      %369 = vsyncadd [#allocation6], %s368
      %s371 = sshll.u32 [#allocation13], 4
      %s372 = int_to_ptr.vmem [resolvable:$true] %s371
      %374 = dma.vmem_to_hbm [thread:$0]  %s372, 128, %s5, [#allocation6]
    $region53: #{tpu_custom_call.1} parent=1 // pred_fallthru
      _
    // Predicated region
    $region54: #{tpu_custom_call.1} parent=1 // pred_check
      _
    $region55: #{tpu_custom_call.1} parent=1 // pred_check_branch
      %376 = sbr.rel (0) target = $region57
    $region56: #{tpu_custom_call.1} parent=1 // pred_region
      %377 = dma.done [#allocation6], 128
    $region57: #{tpu_custom_call.1} parent=1 // pred_fallthru
      _
    %378 = vsyncpa [#allocation5], 1
    %379 = vsyncpa [#allocation8], 1
    %380 = vsyncpa [#allocation11], 1
    %381 = vsyncpa [#allocation6], 1

</llo_original>
